<compile_context>
chip_gen: v7x
topology: tpu7x:2x2x1
jax: 0.10.0
libtpu: 0.0.40
codegen_flags: <defaults>
</compile_context>

<pallas_src>
import functools

import jax
import jax.numpy as jnp
import numpy as np
from jax.experimental import pallas as pl
from jax.experimental.pallas import tpu as pltpu


def _im2col_3x3(a_cm, W, ok_l, ok_r):
    """3x3 'SAME' im2col on a channel-major flat map.

    a_cm: (C, H*W) value.  Returns (9*C, H*W): tap-major stack of the 9
    spatially shifted, zero-padded copies of `a_cm`, ready to be contracted
    against a (Cout, 9*C) weight with a single MXU matmul.

    Shifts are static lane-offset slices of a zero-extended flat buffer
    (vertical out-of-range lands in the zero pad); only horizontal wrap-around
    needs masking, done with the precomputed 0/1 column-validity rows.
    """
    C, HW = a_cm.shape
    zpad = jnp.zeros((C, W + 1), a_cm.dtype)
    ext = jnp.concatenate([zpad, a_cm, zpad], axis=1)        # (C, HW + 2W + 2)
    taps = []
    for dy in (-1, 0, 1):
        for dx in (-1, 0, 1):
            off = (W + 1) + dy * W + dx
            t = ext[:, off:off + HW]
            if dx == -1:
                t = t * ok_l                                  # kill col wrap
            elif dx == 1:
                t = t * ok_r
            taps.append(t)
    return jnp.concatenate(taps, axis=0)                     # (9*C, HW)


def _mapnet_kernel(x_ref, wb_ref, bb_ref, wh_ref, bh_ref, const_ref,
                   points_ref, bbox_ref, *, W):
    """One batch element per grid step (batch axis is 'parallel').

    x_ref:      (1, Cin, HW)  channel-major flat input
    wb_ref:     (F, 9*Cin)    backbone 3x3 conv weight, im2col (tap-major K)
    bb_ref:     (F, 1)        backbone bias
    wh_ref:     (8, 9*F)      fused head weight (rows 0-1 classes, 2-5 bbox,
                              rows 6-7 zero padding to a full sublane group)
    bh_ref:     (8, 1)        fused head bias (padded)
    const_ref:  (4, HW)       [pos_x, pos_y, col_ok_left, col_ok_right]
    points_ref: (1, 2, HW)    softmax-ed class map (lane-dense store)
    bbox_ref:   (1, 4, HW)    bbox map, channels 0/1 already pos-shifted
    """
    pos = const_ref[0:2, :]                                  # (2, HW)
    ok_l = const_ref[2:3, :]                                 # (1, HW)
    ok_r = const_ref[3:4, :]                                 # (1, HW)

    # ---- backbone stand-in: 3x3 conv (stride 1, pad 1) + ReLU, one matmul --
    x = x_ref[0]                                             # (Cin, HW)
    feat = jnp.dot(wb_ref[...], _im2col_3x3(x, W, ok_l, ok_r),
                   preferred_element_type=jnp.float32) + bb_ref[...]
    feat = jnp.maximum(feat, 0.0)                            # (F, HW)

    # ---- fused head: out_classes (2ch) + out_bbox (4ch), one matmul --------
    out = jnp.dot(wh_ref[...], _im2col_3x3(feat, W, ok_l, ok_r),
                  preferred_element_type=jnp.float32) + bh_ref[...]  # (8, HW)

    # Softmax2d over the 2 class channels (rows 0/1).
    l0, l1 = out[0:1], out[1:2]
    m = jnp.maximum(l0, l1)
    e0 = jnp.exp(l0 - m)
    e1 = jnp.exp(l1 - m)
    inv = pl.reciprocal(e0 + e1, approx=True)
    points_ref[0] = jnp.concatenate([e0 * inv, e1 * inv], axis=0).astype(
        points_ref.dtype)

    # bbox (rows 2..5) + pos mask on channels 0/1 only.
    bbox = jnp.concatenate([out[2:4] + pos, out[4:6]], axis=0)
    bbox_ref[0] = bbox.astype(bbox_ref.dtype)


def mapnet_forward(x_nchw, params):
    """Pallas implementation of MapNetTimm.forward. Inputs/outputs are NCHW."""
    wb, bb, wc, bc, wx, bx = params                          # HWIO weights
    N, Cin, H, W = x_nchw.shape
    F = wb.shape[-1]
    HW = H * W

    # NCHW -> (N, C, H*W) is a free reshape (already channel-major).
    x_cm = x_nchw.reshape(N, Cin, HW)

    # Weights to im2col-matmul layout (Cout, 9*Cin), tap-major K axis.
    wbT = jnp.transpose(wb, (3, 0, 1, 2)).reshape(F, 9 * Cin)
    bbT = bb.reshape(F, 1)
    wh = jnp.concatenate([wc, wx], axis=3)                   # (3, 3, F, 6)
    whT = jnp.transpose(wh, (3, 0, 1, 2)).reshape(6, 9 * F)
    whT = jnp.pad(whT, ((0, 2), (0, 0)))                     # pad M: 6 -> 8
    bhT = jnp.pad(jnp.concatenate([bc, bx]).reshape(6, 1), ((0, 2), (0, 0)))

    # Batch-invariant constants, hoisted out of the per-step path:
    # pos_x = c/W, pos_y = flat/(W*H) (matches make_pos_mask), plus the two
    # column-validity masks for the horizontal conv taps.
    flat = jnp.arange(HW, dtype=jnp.float32)
    col = flat % W
    consts = jnp.stack([
        col / W,
        flat / (W * H),
        (col >= 1).astype(jnp.float32),
        (col < (W - 1)).astype(jnp.float32),
    ], axis=0)                                               # (4, HW)

    def full(a):
        nd = a.ndim
        return pl.BlockSpec(a.shape, lambda n, _nd=nd: (0,) * _nd)

    grid_spec = pltpu.PrefetchScalarGridSpec(
        num_scalar_prefetch=0,
        grid=(N,),
        in_specs=[
            pl.BlockSpec((1, Cin, HW), lambda n: (n, 0, 0)),
            full(wbT), full(bbT), full(whT), full(bhT), full(consts),
        ],
        out_specs=[
            pl.BlockSpec((1, 2, HW), lambda n: (n, 0, 0)),
            pl.BlockSpec((1, 4, HW), lambda n: (n, 0, 0)),
        ],
    )

    points_cm, bbox_cm = pl.pallas_call(
        functools.partial(_mapnet_kernel, W=W),
        out_shape=(
            jax.ShapeDtypeStruct((N, 2, HW), jnp.float32),
            jax.ShapeDtypeStruct((N, 4, HW), jnp.float32),
        ),
        grid_spec=grid_spec,
        compiler_params=pltpu.CompilerParams(
            dimension_semantics=("parallel",)),   # v7x: 2 TCs split the batch
    )(x_cm, wbT, bbT, whT, bhT, consts)

    # Free reshapes back to NCHW (N, 2, H, W) / (N, 4, H, W).
    return points_cm.reshape(N, 2, H, W), bbox_cm.reshape(N, 4, H, W)


def reference_forward(x_nchw, params):
    """Pure-JAX reference reproducing the PyTorch semantics (NHWC internally)."""
    wb, bb, wc, bc, wx, bx = params
    x = jnp.transpose(x_nchw, (0, 2, 3, 1))
    dn = ('NHWC', 'HWIO', 'NHWC')
    conv = functools.partial(jax.lax.conv_general_dilated,
                             window_strides=(1, 1), padding='SAME',
                             dimension_numbers=dn)
    feat = jnp.maximum(conv(x, wb) + bb.reshape(1, 1, 1, -1), 0.0)
    logits = conv(feat, wc) + bc.reshape(1, 1, 1, -1)
    points = jax.nn.softmax(logits, axis=-1)
    bbox = conv(feat, wx) + bx.reshape(1, 1, 1, -1)
    H, W = feat.shape[1], feat.shape[2]
    row = jnp.arange(H, dtype=jnp.float32)[:, None] * jnp.ones((1, W), jnp.float32)
    col = jnp.ones((H, 1), jnp.float32) * jnp.arange(W, dtype=jnp.float32)[None, :]
    pos_x = col / W
    pos_y = (row * W + col) / (W * H)
    bbox = bbox.at[..., 0].add(pos_x).at[..., 1].add(pos_y)
    return (jnp.transpose(points, (0, 3, 1, 2)),
            jnp.transpose(bbox, (0, 3, 1, 2)))


def make_params(key, in_channels=4, features=32):
    """Deterministic synthetic parameters (PyTorch conv shapes -> HWIO)."""
    ks = jax.random.split(key, 6)
    # PyTorch Conv2d weight layout is (out, in, kh, kw); convert to HWIO.
    to_hwio = lambda w: jnp.transpose(w, (2, 3, 1, 0))
    wb = to_hwio(jax.random.normal(ks[0], (features, in_channels, 3, 3),
                                   jnp.float32) * 0.1)
    bb = jax.random.normal(ks[1], (features,), jnp.float32) * 0.01
    wc = to_hwio(jax.random.normal(ks[2], (2, features, 3, 3),
                                   jnp.float32) * 0.1)
    bc = jax.random.normal(ks[3], (2,), jnp.float32) * 0.01
    wx = to_hwio(jax.random.normal(ks[4], (4, features, 3, 3),
                                   jnp.float32) * 0.1)
    bx = jax.random.normal(ks[5], (4,), jnp.float32) * 0.01
    return (wb, bb, wc, bc, wx, bx)


if __name__ == "__main__":
    key = jax.random.PRNGKey(0)
    k_x, k_p = jax.random.split(key)

    N, C, H, W = 2, 4, 16, 16
    x = jax.random.normal(k_x, (N, C, H, W), jnp.float32)
    params = make_params(k_p, in_channels=C, features=32)

    points, bboxes = jax.jit(mapnet_forward)(x, params)
    jax.block_until_ready((points, bboxes))

    ref_points, ref_bboxes = reference_forward(x, params)
    np.testing.assert_allclose(np.asarray(points), np.asarray(ref_points),
                               rtol=1e-2, atol=1e-2)
    np.testing.assert_allclose(np.asarray(bboxes), np.asarray(ref_bboxes),
                               rtol=1e-2, atol=1e-2)

    assert points.shape == (N, 2, H, W)
    assert bboxes.shape == (N, 4, H, W)
    print("KERNEL_OK")
</pallas_src>

<mosaic_0001>
module attributes {stable_mosaic.version = 11 : i64} {
  func.func @_mapnet_kernel(%arg0: i32, %arg1: memref<1x4x256xf32, #tpu.memory_space<vmem>>, %arg2: memref<32x36xf32, #tpu.memory_space<vmem>>, %arg3: memref<32x1xf32, #tpu.memory_space<vmem>>, %arg4: memref<8x288xf32, #tpu.memory_space<vmem>>, %arg5: memref<8x1xf32, #tpu.memory_space<vmem>>, %arg6: memref<4x256xf32, #tpu.memory_space<vmem>>, %arg7: memref<1x2x256xf32, #tpu.memory_space<vmem>>, %arg8: memref<1x4x256xf32, #tpu.memory_space<vmem>>) attributes {dimension_semantics = [#tpu.dimension_semantics<parallel>], iteration_bounds = array<i64: 2>, scalar_prefetch = 0 : i64, scratch_operands = 0 : i64, tpu.core_type = #tpu.core_type<tc>, window_params = [{transform_indices = @transform_0, window_bounds = array<i64: 1, 4, 256>}, {pipeline_mode = #tpu.pipeline_mode<synchronous>, transform_indices = @transform_1, window_bounds = array<i64: 32, 36>}, {pipeline_mode = #tpu.pipeline_mode<synchronous>, transform_indices = @transform_2, window_bounds = array<i64: 32, 1>}, {pipeline_mode = #tpu.pipeline_mode<synchronous>, transform_indices = @transform_3, window_bounds = array<i64: 8, 288>}, {pipeline_mode = #tpu.pipeline_mode<synchronous>, transform_indices = @transform_4, window_bounds = array<i64: 8, 1>}, {pipeline_mode = #tpu.pipeline_mode<synchronous>, transform_indices = @transform_5, window_bounds = array<i64: 4, 256>}, {transform_indices = @transform_6, window_bounds = array<i64: 1, 2, 256>}, {transform_indices = @transform_7, window_bounds = array<i64: 1, 4, 256>}]} {
    %c0 = arith.constant 0 : index
    %c0_0 = arith.constant 0 : index
    %0 = vector.load %arg6[%c0, %c0_0] : memref<4x256xf32, #tpu.memory_space<vmem>>, vector<2x256xf32>
    %c2 = arith.constant 2 : index
    %c0_1 = arith.constant 0 : index
    %1 = vector.load %arg6[%c2, %c0_1] : memref<4x256xf32, #tpu.memory_space<vmem>>, vector<1x256xf32>
    %c3 = arith.constant 3 : index
    %c0_2 = arith.constant 0 : index
    %2 = vector.load %arg6[%c3, %c0_2] : memref<4x256xf32, #tpu.memory_space<vmem>>, vector<1x256xf32>
    %c0_3 = arith.constant 0 : index
    %c0_4 = arith.constant 0 : index
    %c0_5 = arith.constant 0 : index
    %3 = vector.load %arg1[%c0_3, %c0_4, %c0_5] : memref<1x4x256xf32, #tpu.memory_space<vmem>>, vector<1x4x256xf32>
    %4 = vector.shape_cast %3 : vector<1x4x256xf32> to vector<4x256xf32>
    %c0_6 = arith.constant 0 : index
    %c0_7 = arith.constant 0 : index
    %5 = vector.load %arg2[%c0_6, %c0_7] : memref<32x36xf32, #tpu.memory_space<vmem>>, vector<32x36xf32>
    %cst = arith.constant 0.000000e+00 : f32
    %6 = vector.broadcast %cst : f32 to vector<4x17xf32>
    %7 = tpu.concatenate %6, %4, %6 in 1 : vector<4x17xf32>, vector<4x256xf32>, vector<4x17xf32> -> vector<4x290xf32>
    %8 = vector.extract_strided_slice %7 {offsets = [0, 0], sizes = [4, 256], strides = [1, 1]} : vector<4x290xf32> to vector<4x256xf32>
    %9 = vector.broadcast %1 : vector<1x256xf32> to vector<4x256xf32>
    %10 = arith.mulf %8, %9 : vector<4x256xf32>
    %11 = vector.extract_strided_slice %7 {offsets = [0, 1], sizes = [4, 256], strides = [1, 1]} : vector<4x290xf32> to vector<4x256xf32>
    %12 = vector.extract_strided_slice %7 {offsets = [0, 2], sizes = [4, 256], strides = [1, 1]} : vector<4x290xf32> to vector<4x256xf32>
    %13 = vector.broadcast %2 : vector<1x256xf32> to vector<4x256xf32>
    %14 = arith.mulf %12, %13 : vector<4x256xf32>
    %15 = vector.extract_strided_slice %7 {offsets = [0, 16], sizes = [4, 256], strides = [1, 1]} : vector<4x290xf32> to vector<4x256xf32>
    %16 = vector.broadcast %1 : vector<1x256xf32> to vector<4x256xf32>
    %17 = arith.mulf %15, %16 : vector<4x256xf32>
    %18 = vector.extract_strided_slice %7 {offsets = [0, 17], sizes = [4, 256], strides = [1, 1]} : vector<4x290xf32> to vector<4x256xf32>
    %19 = vector.extract_strided_slice %7 {offsets = [0, 18], sizes = [4, 256], strides = [1, 1]} : vector<4x290xf32> to vector<4x256xf32>
    %20 = vector.broadcast %2 : vector<1x256xf32> to vector<4x256xf32>
    %21 = arith.mulf %19, %20 : vector<4x256xf32>
    %22 = vector.extract_strided_slice %7 {offsets = [0, 32], sizes = [4, 256], strides = [1, 1]} : vector<4x290xf32> to vector<4x256xf32>
    %23 = vector.broadcast %1 : vector<1x256xf32> to vector<4x256xf32>
    %24 = arith.mulf %22, %23 : vector<4x256xf32>
    %25 = vector.extract_strided_slice %7 {offsets = [0, 33], sizes = [4, 256], strides = [1, 1]} : vector<4x290xf32> to vector<4x256xf32>
    %26 = vector.extract_strided_slice %7 {offsets = [0, 34], sizes = [4, 256], strides = [1, 1]} : vector<4x290xf32> to vector<4x256xf32>
    %27 = vector.broadcast %2 : vector<1x256xf32> to vector<4x256xf32>
    %28 = arith.mulf %26, %27 : vector<4x256xf32>
    %29 = tpu.concatenate %10, %11, %14, %17, %18, %21, %24, %25, %28 in 0 : vector<4x256xf32>, vector<4x256xf32>, vector<4x256xf32>, vector<4x256xf32>, vector<4x256xf32>, vector<4x256xf32>, vector<4x256xf32>, vector<4x256xf32>, vector<4x256xf32> -> vector<36x256xf32>
    %cst_8 = arith.constant dense<0.000000e+00> : vector<32x256xf32>
    %30 = tpu.matmul %5, %29, %cst_8 {dimension_numbers = #tpu.dot_dimension_numbers<[1], [0], [0], [1], [0, 0, 1, 1], [], []>} : vector<32x36xf32>, vector<36x256xf32>, vector<32x256xf32> -> vector<32x256xf32>
    %c0_9 = arith.constant 0 : index
    %c0_10 = arith.constant 0 : index
    %31 = vector.load %arg3[%c0_9, %c0_10] : memref<32x1xf32, #tpu.memory_space<vmem>>, vector<32x1xf32>
    %32 = vector.broadcast %31 : vector<32x1xf32> to vector<32x256xf32>
    %33 = arith.addf %30, %32 : vector<32x256xf32>
    %cst_11 = arith.constant 0.000000e+00 : f32
    %34 = vector.broadcast %cst_11 : f32 to vector<32x256xf32>
    %35 = arith.maximumf %33, %34 : vector<32x256xf32>
    %c0_12 = arith.constant 0 : index
    %c0_13 = arith.constant 0 : index
    %36 = vector.load %arg4[%c0_12, %c0_13] : memref<8x288xf32, #tpu.memory_space<vmem>>, vector<8x288xf32>
    %cst_14 = arith.constant 0.000000e+00 : f32
    %37 = vector.broadcast %cst_14 : f32 to vector<32x17xf32>
    %38 = tpu.concatenate %37, %35, %37 in 1 : vector<32x17xf32>, vector<32x256xf32>, vector<32x17xf32> -> vector<32x290xf32>
    %39 = vector.extract_strided_slice %38 {offsets = [0, 0], sizes = [32, 256], strides = [1, 1]} : vector<32x290xf32> to vector<32x256xf32>
    %40 = vector.broadcast %1 : vector<1x256xf32> to vector<32x256xf32>
    %41 = arith.mulf %39, %40 : vector<32x256xf32>
    %42 = vector.extract_strided_slice %38 {offsets = [0, 1], sizes = [32, 256], strides = [1, 1]} : vector<32x290xf32> to vector<32x256xf32>
    %43 = vector.extract_strided_slice %38 {offsets = [0, 2], sizes = [32, 256], strides = [1, 1]} : vector<32x290xf32> to vector<32x256xf32>
    %44 = vector.broadcast %2 : vector<1x256xf32> to vector<32x256xf32>
    %45 = arith.mulf %43, %44 : vector<32x256xf32>
    %46 = vector.extract_strided_slice %38 {offsets = [0, 16], sizes = [32, 256], strides = [1, 1]} : vector<32x290xf32> to vector<32x256xf32>
    %47 = vector.broadcast %1 : vector<1x256xf32> to vector<32x256xf32>
    %48 = arith.mulf %46, %47 : vector<32x256xf32>
    %49 = vector.extract_strided_slice %38 {offsets = [0, 17], sizes = [32, 256], strides = [1, 1]} : vector<32x290xf32> to vector<32x256xf32>
    %50 = vector.extract_strided_slice %38 {offsets = [0, 18], sizes = [32, 256], strides = [1, 1]} : vector<32x290xf32> to vector<32x256xf32>
    %51 = vector.broadcast %2 : vector<1x256xf32> to vector<32x256xf32>
    %52 = arith.mulf %50, %51 : vector<32x256xf32>
    %53 = vector.extract_strided_slice %38 {offsets = [0, 32], sizes = [32, 256], strides = [1, 1]} : vector<32x290xf32> to vector<32x256xf32>
    %54 = vector.broadcast %1 : vector<1x256xf32> to vector<32x256xf32>
    %55 = arith.mulf %53, %54 : vector<32x256xf32>
    %56 = vector.extract_strided_slice %38 {offsets = [0, 33], sizes = [32, 256], strides = [1, 1]} : vector<32x290xf32> to vector<32x256xf32>
    %57 = vector.extract_strided_slice %38 {offsets = [0, 34], sizes = [32, 256], strides = [1, 1]} : vector<32x290xf32> to vector<32x256xf32>
    %58 = vector.broadcast %2 : vector<1x256xf32> to vector<32x256xf32>
    %59 = arith.mulf %57, %58 : vector<32x256xf32>
    %60 = tpu.concatenate %41, %42, %45, %48, %49, %52, %55, %56, %59 in 0 : vector<32x256xf32>, vector<32x256xf32>, vector<32x256xf32>, vector<32x256xf32>, vector<32x256xf32>, vector<32x256xf32>, vector<32x256xf32>, vector<32x256xf32>, vector<32x256xf32> -> vector<288x256xf32>
    %cst_15 = arith.constant dense<0.000000e+00> : vector<8x256xf32>
    %61 = tpu.matmul %36, %60, %cst_15 {dimension_numbers = #tpu.dot_dimension_numbers<[1], [0], [0], [1], [0, 0, 1, 1], [], []>} : vector<8x288xf32>, vector<288x256xf32>, vector<8x256xf32> -> vector<8x256xf32>
    %c0_16 = arith.constant 0 : index
    %c0_17 = arith.constant 0 : index
    %62 = vector.load %arg5[%c0_16, %c0_17] : memref<8x1xf32, #tpu.memory_space<vmem>>, vector<8x1xf32>
    %63 = vector.broadcast %62 : vector<8x1xf32> to vector<8x256xf32>
    %64 = arith.addf %61, %63 : vector<8x256xf32>
    %65 = vector.extract_strided_slice %64 {offsets = [0, 0], sizes = [1, 256], strides = [1, 1]} : vector<8x256xf32> to vector<1x256xf32>
    %66 = vector.extract_strided_slice %64 {offsets = [1, 0], sizes = [1, 256], strides = [1, 1]} : vector<8x256xf32> to vector<1x256xf32>
    %67 = arith.maximumf %65, %66 : vector<1x256xf32>
    %68 = arith.subf %65, %67 : vector<1x256xf32>
    %69 = math.exp %68 : vector<1x256xf32>
    %70 = arith.subf %66, %67 : vector<1x256xf32>
    %71 = math.exp %70 : vector<1x256xf32>
    %72 = arith.addf %69, %71 : vector<1x256xf32>
    %73 = tpu.reciprocal %72 {approx = true} : vector<1x256xf32> -> vector<1x256xf32>
    %74 = arith.mulf %69, %73 : vector<1x256xf32>
    %75 = arith.mulf %71, %73 : vector<1x256xf32>
    %76 = tpu.concatenate %74, %75 in 0 : vector<1x256xf32>, vector<1x256xf32> -> vector<2x256xf32>
    %c0_18 = arith.constant 0 : index
    %c0_19 = arith.constant 0 : index
    %c0_20 = arith.constant 0 : index
    %77 = vector.load %arg7[%c0_18, %c0_19, %c0_20] : memref<1x2x256xf32, #tpu.memory_space<vmem>>, vector<1x2x256xf32>
    %78 = vector.shape_cast %77 : vector<1x2x256xf32> to vector<2x256xf32>
    %79 = vector.shape_cast %76 : vector<2x256xf32> to vector<1x2x256xf32>
    tpu.vector_store %arg7[%c0_18, %c0_19, %c0_20], %79 {strides = array<i32>} : memref<1x2x256xf32, #tpu.memory_space<vmem>>, vector<1x2x256xf32>,
    %80 = vector.extract_strided_slice %64 {offsets = [2, 0], sizes = [2, 256], strides = [1, 1]} : vector<8x256xf32> to vector<2x256xf32>
    %81 = arith.addf %80, %0 : vector<2x256xf32>
    %82 = vector.extract_strided_slice %64 {offsets = [4, 0], sizes = [2, 256], strides = [1, 1]} : vector<8x256xf32> to vector<2x256xf32>
    %83 = tpu.concatenate %81, %82 in 0 : vector<2x256xf32>, vector<2x256xf32> -> vector<4x256xf32>
    %c0_21 = arith.constant 0 : index
    %c0_22 = arith.constant 0 : index
    %c0_23 = arith.constant 0 : index
    %84 = vector.load %arg8[%c0_21, %c0_22, %c0_23] : memref<1x4x256xf32, #tpu.memory_space<vmem>>, vector<1x4x256xf32>
    %85 = vector.shape_cast %84 : vector<1x4x256xf32> to vector<4x256xf32>
    %86 = vector.shape_cast %83 : vector<4x256xf32> to vector<1x4x256xf32>
    tpu.vector_store %arg8[%c0_21, %c0_22, %c0_23], %86 {strides = array<i32>} : memref<1x4x256xf32, #tpu.memory_space<vmem>>, vector<1x4x256xf32>,
    return
  }
  func.func @transform_0(%arg0: i32) -> (i32, i32, i32) {
    %c0_i32 = arith.constant 0 : i32
    %c0_i32_0 = arith.constant 0 : i32
    %c0_i32_1 = arith.constant 0 : i32
    return %arg0, %c0_i32, %c0_i32_0 : i32, i32, i32
  }
  func.func @transform_1(%arg0: i32) -> (i32, i32) {
    %c0_i32 = arith.constant 0 : i32
    %c0_i32_0 = arith.constant 0 : i32
    %c0_i32_1 = arith.constant 0 : i32
    return %c0_i32, %c0_i32_0 : i32, i32
  }
  func.func @transform_2(%arg0: i32) -> (i32, i32) {
    %c0_i32 = arith.constant 0 : i32
    %c0_i32_0 = arith.constant 0 : i32
    %c0_i32_1 = arith.constant 0 : i32
    return %c0_i32, %c0_i32_0 : i32, i32
  }
  func.func @transform_3(%arg0: i32) -> (i32, i32) {
    %c0_i32 = arith.constant 0 : i32
    %c0_i32_0 = arith.constant 0 : i32
    %c0_i32_1 = arith.constant 0 : i32
    return %c0_i32, %c0_i32_0 : i32, i32
  }
  func.func @transform_4(%arg0: i32) -> (i32, i32) {
    %c0_i32 = arith.constant 0 : i32
    %c0_i32_0 = arith.constant 0 : i32
    %c0_i32_1 = arith.constant 0 : i32
    return %c0_i32, %c0_i32_0 : i32, i32
  }
  func.func @transform_5(%arg0: i32) -> (i32, i32) {
    %c0_i32 = arith.constant 0 : i32
    %c0_i32_0 = arith.constant 0 : i32
    %c0_i32_1 = arith.constant 0 : i32
    return %c0_i32, %c0_i32_0 : i32, i32
  }
  func.func @transform_6(%arg0: i32) -> (i32, i32, i32) {
    %c0_i32 = arith.constant 0 : i32
    %c0_i32_0 = arith.constant 0 : i32
    %c0_i32_1 = arith.constant 0 : i32
    return %arg0, %c0_i32, %c0_i32_0 : i32, i32, i32
  }
  func.func @transform_7(%arg0: i32) -> (i32, i32, i32) {
    %c0_i32 = arith.constant 0 : i32
    %c0_i32_0 = arith.constant 0 : i32
    %c0_i32_1 = arith.constant 0 : i32
    return %arg0, %c0_i32, %c0_i32_0 : i32, i32, i32
  }
}

</mosaic_0001>

<llo_original>
// kernel: mapnet_forward.1
$region0: #{mapnet_forward.1}
  #allocation0 [shape = 'u32[]', space=smem, size = 0x4, offset = 0x4, fixed_abs, tag = 'smem constant byte address 0x4 - core index']
  #allocation1 [shape = 'u32[144,128]{1,0:T(1,128)}', space=vmem, size = 0x12000, scoped, tag = 'internal scratch']
  %s0 = inlined_call_operand.vmem [shape: f32[2,4,256], index: 0, kind: input, shape index: {}]
  %s1 = inlined_call_operand.vmem [shape: f32[32,36], index: 1, kind: input, shape index: {}]
  %s2 = inlined_call_operand.vmem [shape: f32[32,1], index: 2, kind: input, shape index: {}]
  %s3 = inlined_call_operand.vmem [shape: f32[8,288], index: 3, kind: input, shape index: {}]
  %s4 = inlined_call_operand.vmem [shape: f32[8,1], index: 4, kind: input, shape index: {}]
  %s5 = inlined_call_operand.vmem [shape: f32[4,256], index: 5, kind: input, shape index: {}]
  %s6 = inlined_call_operand.vmem [shape: f32[2,2,256], index: 6, kind: output, shape index: {0}]
  %s7 = inlined_call_operand.vmem [shape: f32[2,4,256], index: 7, kind: output, shape index: {1}]
  %8 = xla_tuple %s6, %s7
  %s9 = sld [smem:[#allocation0]]
  $region65: #{mapnet_forward.1} parent=0
    _
  %s11 = ssub.s32 1, %s9
  %s12 = scalar_select 0, %s11, %s9
  loop: start=0, step=1, limit=4
  $region2: #{mapnet_forward.1} parent=0 // loop_pre_header
    _
  $region3: #{mapnet_forward.1} parent=0 // loop_header
    %s14 = sphi 0, %s18
    %p15 = scmp.ge.s32.totalorder %s14, 4
    %s24 = sphi 0, %s26
    %s27 = sphi 0, %s24
    %s28 = sphi 0, %s27
    %s44 = sphi 0, %s28
    %s48 = sphi 0, %s48
    %s50 = sphi 0, %s48
    %s51 = sphi 0, %s50
    %s65 = sphi 0, %s51
    %s69 = sphi 0, %s69
    %s71 = sphi 0, %s69
    %s72 = sphi 0, %s71
    %s86 = sphi 0, %s72
    %s90 = sphi 0, %s90
    %s92 = sphi 0, %s90
    %s93 = sphi 0, %s92
    %s107 = sphi 0, %s93
    %s111 = sphi 0, %s111
    %s113 = sphi 0, %s111
    %s114 = sphi 0, %s113
    %s128 = sphi 0, %s114
    %s132 = sphi 0, %s132
    %s134 = sphi 0, %s132
    %s135 = sphi 0, %s134
    %s149 = sphi 0, %s135
    %s155 = sphi 0, %s157
    %s158 = sphi 0, %s155
    %s159 = sphi 0, %s158
    %s175 = sphi 0, %s159
    %s181 = sphi 0, %s183
    %s184 = sphi 0, %s181
    %s185 = sphi 0, %s184
    %s201 = sphi 0, %s185
  $region4: #{mapnet_forward.1} parent=0 // loop_header_branch
    %17 = sbr.rel (%p15) target = $region8
  $region5: #{mapnet_forward.1} parent=0 // loop_body
    %s19 = ssub.s32 %s14, 1
    %s20 = ssub.s32 %s14, 2
    %s21 = sadd.s32 %s14, 1
    %s22 = ssub.s32 %s14, %s21
    %p23 = scmp.eq.s32.totalorder %s22, 0
    %s25 = sadd.s32 %s24, 1
    %s26 = scalar_select %p23, %s24, %s25
    %p29 = pneg %p23
    %p30 = scmp.eq.s32.totalorder %s14, 1
    %p31 = por %p29, %p30
    %p32 = scmp.ne.s32.totalorder %s24, %s27
    %p33 = scmp.eq.s32.totalorder %s14, 0
    %p34 = por %p32, %p33
    %p35 = scmp.ne.s32.totalorder %s24, %s27
    %p36 = scmp.eq.s32.totalorder %s19, 1
    %p37 = por %p35, %p36
    %p38 = scmp.ne.s32.totalorder %s27, %s28
    %p39 = scmp.eq.s32.totalorder %s19, 0
    %p40 = por %p38, %p39
    %p41 = scmp.ne.s32.totalorder %s27, %s28
    %p42 = scmp.eq.s32.totalorder %s20, 1
    %p43 = por %p41, %p42
    %p45 = scmp.ne.s32.totalorder %s28, %s44
    %p46 = scmp.eq.s32.totalorder %s20, 0
    %p47 = por %p45, %p46
    %s49 = sadd.s32 %s48, 1
    %p52 = scmp.eq.s32.totalorder %s14, 1
    %p53 = scmp.ne.s32.totalorder %s48, %s50
    %p54 = scmp.eq.s32.totalorder %s14, 0
    %p55 = por %p53, %p54
    %p56 = scmp.ne.s32.totalorder %s48, %s50
    %p57 = scmp.eq.s32.totalorder %s19, 1
    %p58 = por %p56, %p57
    %p59 = scmp.ne.s32.totalorder %s50, %s51
    %p60 = scmp.eq.s32.totalorder %s19, 0
    %p61 = por %p59, %p60
    %p62 = scmp.ne.s32.totalorder %s50, %s51
    %p63 = scmp.eq.s32.totalorder %s20, 1
    %p64 = por %p62, %p63
    %p66 = scmp.ne.s32.totalorder %s51, %s65
    %p67 = scmp.eq.s32.totalorder %s20, 0
    %p68 = por %p66, %p67
    %s70 = sadd.s32 %s69, 1
    %p73 = scmp.eq.s32.totalorder %s14, 1
    %p74 = scmp.ne.s32.totalorder %s69, %s71
    %p75 = scmp.eq.s32.totalorder %s14, 0
    %p76 = por %p74, %p75
    %p77 = scmp.ne.s32.totalorder %s69, %s71
    %p78 = scmp.eq.s32.totalorder %s19, 1
    %p79 = por %p77, %p78
    %p80 = scmp.ne.s32.totalorder %s71, %s72
    %p81 = scmp.eq.s32.totalorder %s19, 0
    %p82 = por %p80, %p81
    %p83 = scmp.ne.s32.totalorder %s71, %s72
    %p84 = scmp.eq.s32.totalorder %s20, 1
    %p85 = por %p83, %p84
    %p87 = scmp.ne.s32.totalorder %s72, %s86
    %p88 = scmp.eq.s32.totalorder %s20, 0
    %p89 = por %p87, %p88
    %s91 = sadd.s32 %s90, 1
    %p94 = scmp.eq.s32.totalorder %s14, 1
    %p95 = scmp.ne.s32.totalorder %s90, %s92
    %p96 = scmp.eq.s32.totalorder %s14, 0
    %p97 = por %p95, %p96
    %p98 = scmp.ne.s32.totalorder %s90, %s92
    %p99 = scmp.eq.s32.totalorder %s19, 1
    %p100 = por %p98, %p99
    %p101 = scmp.ne.s32.totalorder %s92, %s93
    %p102 = scmp.eq.s32.totalorder %s19, 0
    %p103 = por %p101, %p102
    %p104 = scmp.ne.s32.totalorder %s92, %s93
    %p105 = scmp.eq.s32.totalorder %s20, 1
    %p106 = por %p104, %p105
    %p108 = scmp.ne.s32.totalorder %s93, %s107
    %p109 = scmp.eq.s32.totalorder %s20, 0
    %p110 = por %p108, %p109
    %s112 = sadd.s32 %s111, 1
    %p115 = scmp.eq.s32.totalorder %s14, 1
    %p116 = scmp.ne.s32.totalorder %s111, %s113
    %p117 = scmp.eq.s32.totalorder %s14, 0
    %p118 = por %p116, %p117
    %p119 = scmp.ne.s32.totalorder %s111, %s113
    %p120 = scmp.eq.s32.totalorder %s19, 1
    %p121 = por %p119, %p120
    %p122 = scmp.ne.s32.totalorder %s113, %s114
    %p123 = scmp.eq.s32.totalorder %s19, 0
    %p124 = por %p122, %p123
    %p125 = scmp.ne.s32.totalorder %s113, %s114
    %p126 = scmp.eq.s32.totalorder %s20, 1
    %p127 = por %p125, %p126
    %p129 = scmp.ne.s32.totalorder %s114, %s128
    %p130 = scmp.eq.s32.totalorder %s20, 0
    %p131 = por %p129, %p130
    %s133 = sadd.s32 %s132, 1
    %p136 = scmp.eq.s32.totalorder %s14, 1
    %p137 = scmp.ne.s32.totalorder %s132, %s134
    %p138 = scmp.eq.s32.totalorder %s14, 0
    %p139 = por %p137, %p138
    %p140 = scmp.ne.s32.totalorder %s132, %s134
    %p141 = scmp.eq.s32.totalorder %s19, 1
    %p142 = por %p140, %p141
    %p143 = scmp.ne.s32.totalorder %s134, %s135
    %p144 = scmp.eq.s32.totalorder %s19, 0
    %p145 = por %p143, %p144
    %p146 = scmp.ne.s32.totalorder %s134, %s135
    %p147 = scmp.eq.s32.totalorder %s20, 1
    %p148 = por %p146, %p147
    %p150 = scmp.ne.s32.totalorder %s135, %s149
    %p151 = scmp.eq.s32.totalorder %s20, 0
    %p152 = por %p150, %p151
    %s153 = ssub.s32 %s14, %s21
    %p154 = scmp.eq.s32.totalorder %s153, 0
    %s156 = sadd.s32 %s155, 1
    %s157 = scalar_select %p154, %s155, %s156
    %p160 = pneg %p154
    %p161 = scmp.eq.s32.totalorder %s14, 1
    %p162 = por %p160, %p161
    %p163 = scmp.ne.s32.totalorder %s155, %s158
    %p164 = scmp.eq.s32.totalorder %s14, 0
    %p165 = por %p163, %p164
    %p166 = scmp.ne.s32.totalorder %s155, %s158
    %p167 = scmp.eq.s32.totalorder %s19, 1
    %p168 = por %p166, %p167
    %p169 = scmp.ne.s32.totalorder %s158, %s159
    %p170 = scmp.eq.s32.totalorder %s19, 0
    %p171 = por %p169, %p170
    %p172 = scmp.ne.s32.totalorder %s158, %s159
    %p173 = scmp.eq.s32.totalorder %s20, 1
    %p174 = por %p172, %p173
    %p176 = scmp.ne.s32.totalorder %s159, %s175
    %p177 = scmp.eq.s32.totalorder %s20, 0
    %p178 = por %p176, %p177
    %s179 = ssub.s32 %s14, %s21
    %p180 = scmp.eq.s32.totalorder %s179, 0
    %s182 = sadd.s32 %s181, 1
    %s183 = scalar_select %p180, %s181, %s182
    %p186 = pneg %p180
    %p187 = scmp.eq.s32.totalorder %s14, 1
    %p188 = por %p186, %p187
    %p189 = scmp.ne.s32.totalorder %s181, %s184
    %p190 = scmp.eq.s32.totalorder %s14, 0
    %p191 = por %p189, %p190
    %p192 = scmp.ne.s32.totalorder %s181, %s184
    %p193 = scmp.eq.s32.totalorder %s19, 1
    %p194 = por %p192, %p193
    %p195 = scmp.ne.s32.totalorder %s184, %s185
    %p196 = scmp.eq.s32.totalorder %s19, 0
    %p197 = por %p195, %p196
    %p198 = scmp.ne.s32.totalorder %s184, %s185
    %p199 = scmp.eq.s32.totalorder %s20, 1
    %p200 = por %p198, %p199
    %p202 = scmp.ne.s32.totalorder %s185, %s201
    %p203 = scmp.eq.s32.totalorder %s20, 0
    %p204 = por %p202, %p203
    %p205 = scmp.le.s32.totalorder 1, %s14
    %p206 = scmp.lt.s32.totalorder %s14, 3
    %p207 = pnand %p205, %p206
    %p208 = pneg %p207
    // Predicated region
    $region9: #{mapnet_forward.1} parent=5 // pred_check
      _
    $region10: #{mapnet_forward.1} parent=5 // pred_check_branch
      %210 = sbr.rel (%p207) target = $region12
    $region11: #{mapnet_forward.1} parent=5 // pred_region
      %s211 = ssub.s32 %s14, 1
      // Predicated region
      $region13: #{mapnet_forward.1} parent=11 // pred_check
        %p212 = pneg %p61
      $region14: #{mapnet_forward.1} parent=11 // pred_check_branch
        %214 = sbr.rel (%p212) target = $region16
      $region15: #{mapnet_forward.1} parent=11 // pred_region
        _
      $region16: #{mapnet_forward.1} parent=11 // pred_fallthru
        _
      // Predicated region
      $region17: #{mapnet_forward.1} parent=11 // pred_check
        %p215 = pneg %p82
      $region18: #{mapnet_forward.1} parent=11 // pred_check_branch
        %217 = sbr.rel (%p215) target = $region20
      $region19: #{mapnet_forward.1} parent=11 // pred_region
        _
      $region20: #{mapnet_forward.1} parent=11 // pred_fallthru
        _
      // Predicated region
      $region21: #{mapnet_forward.1} parent=11 // pred_check
        %p218 = pneg %p103
      $region22: #{mapnet_forward.1} parent=11 // pred_check_branch
        %220 = sbr.rel (%p218) target = $region24
      $region23: #{mapnet_forward.1} parent=11 // pred_region
        _
      $region24: #{mapnet_forward.1} parent=11 // pred_fallthru
        _
      // Predicated region
      $region25: #{mapnet_forward.1} parent=11 // pred_check
        %p221 = pneg %p124
      $region26: #{mapnet_forward.1} parent=11 // pred_check_branch
        %223 = sbr.rel (%p221) target = $region28
      $region27: #{mapnet_forward.1} parent=11 // pred_region
        _
      $region28: #{mapnet_forward.1} parent=11 // pred_fallthru
        _
      // Predicated region
      $region29: #{mapnet_forward.1} parent=11 // pred_check
        %p224 = pneg %p145
      $region30: #{mapnet_forward.1} parent=11 // pred_check_branch
        %226 = sbr.rel (%p224) target = $region32
      $region31: #{mapnet_forward.1} parent=11 // pred_region
        _
      $region32: #{mapnet_forward.1} parent=11 // pred_fallthru
        _
    $region12: #{mapnet_forward.1} parent=5 // pred_fallthru
      _
    %p227 = scmp.lt.s32.totalorder %s14, 2
    // Predicated region
    $region33: #{mapnet_forward.1} parent=5 // pred_check
      %p228 = pneg %p227
    $region34: #{mapnet_forward.1} parent=5 // pred_check_branch
      %230 = sbr.rel (%p228) target = $region36
    $region35: #{mapnet_forward.1} parent=5 // pred_region
      // Predicated region
      $region37: #{mapnet_forward.1} parent=35 // pred_check
        %p231 = pneg %p34
      $region38: #{mapnet_forward.1} parent=35 // pred_check_branch
        %233 = sbr.rel (%p231) target = $region40
      $region39: #{mapnet_forward.1} parent=35 // pred_region
        %p234 = scmp.lt.s32.totalorder %s14, 1
        %s235 = scalar_select %p234, %s14, 1
        %s236 = smul.addr %s235, 2
        %s237 = smul.addr %s236, 4
        %s238 = scalar_lea.vmem %s0, %s237
      $region40: #{mapnet_forward.1} parent=35 // pred_fallthru
        _
    $region36: #{mapnet_forward.1} parent=5 // pred_fallthru
      _
    %p239 = scmp.le.s32.totalorder 1, %s14
    %p240 = scmp.lt.s32.totalorder %s14, 3
    %p241 = pnand %p239, %p240
    %p242 = pneg %p241
    // Predicated region
    $region41: #{mapnet_forward.1} parent=5 // pred_check
      _
    $region42: #{mapnet_forward.1} parent=5 // pred_check_branch
      %244 = sbr.rel (%p241) target = $region44
    $region43: #{mapnet_forward.1} parent=5 // pred_region
      %s245 = ssub.s32 %s14, 1
      %p246 = scmp.lt.s32.totalorder %s19, 1
      %s247 = scalar_select %p246, %s19, 1
      %s248 = smul.addr %s247, 2
      %s249 = smul.addr %s248, 4
      %s250 = scalar_lea.vmem %s0, %s249
      %p251 = pneg %p40
      %p252 = pneg %p37
      %p253 = pneg %p61
      %p254 = pneg %p58
      %p255 = pneg %p82
      %p256 = pneg %p79
      %p257 = pneg %p103
      %p258 = pneg %p100
      %p259 = pneg %p124
      %p260 = pneg %p121
      %p261 = pneg %p145
      %p262 = pneg %p142
      %p263 = pneg %p171
      %p264 = pneg %p168
      %p265 = scmp.lt.s32.totalorder %s19, 1
      %s266 = scalar_select %p265, %s19, 1
      %s267 = smul.addr %s266, 2
      %s268 = smul.addr %s267, 2
      %s269 = scalar_lea.vmem %s6, %s268
      %p270 = pneg %p197
      %p271 = pneg %p194
      %p272 = scmp.lt.s32.totalorder %s19, 1
      %s273 = scalar_select %p272, %s19, 1
      %s274 = smul.addr %s273, 2
      %s275 = smul.addr %s274, 4
      %s276 = scalar_lea.vmem %s7, %s275
      %p277 = scmp.lt.s32.totalorder %s19, 1
      %s278 = scalar_select %p277, %s19, 1
      %s279 = smul.addr %s278, 2
      %s280 = smul.addr %s279, 4
      %s281 = scalar_lea.vmem %s0, %s280
      %p282 = scmp.lt.s32.totalorder %s19, 1
      %s283 = scalar_select %p282, %s19, 1
      %s284 = smul.addr %s283, 2
      %s285 = smul.addr %s284, 2
      %s286 = scalar_lea.vmem %s6, %s285
      %p287 = scmp.lt.s32.totalorder %s19, 1
      %s288 = scalar_select %p287, %s19, 1
      %s289 = smul.addr %s288, 2
      %s290 = smul.addr %s289, 4
      %s291 = scalar_lea.vmem %s7, %s290
      %v292 = vld [vmem:[%s5] sm:$0x33]
      %s293 = scalar_lea.vmem %s5, 2
      %v294 = vld [vmem:[%s293] ss:$4 sm:$0x3]
      %s295 = scalar_lea.vmem %s5, 3
      %v296 = vld [vmem:[%s295] ss:$4 sm:$0x3]
      %v297 = vld [vmem:[%s281] sm:$0xff]
      %v298 = vld [vmem:[%s1] sm:$0xff]
      %v299 = vld [vmem:[%s1 + $0x8] sm:$0xff]
      %v300 = vld [vmem:[%s1 + $0x10] sm:$0xff]
      %v301 = vld [vmem:[%s1 + $0x18] sm:$0xff]
      %v303 = vcombine.high %v297, %v297
      %304 = vrot.lane.b32.xlu0 %v297, 17
      %v305 = vpop.permute.xlu0 %304
      %306 = vrot.lane.b32.xlu0 %v303, 17
      %v307 = vpop.permute.xlu0 %306
      %vm308 = vcmask 138240
      %v309 = vsel %vm308, %v305, %v307
      %v313 = vsel %vm308, 0.0, %v305
      %v314 = vsel %vm308, %v307, 0.0
      %v316 = vlaneseq
      %v317 = vshrl.u32 %v316, 7
      %v318 = vsub.s32 0, %v317
      %v319 = vrot.slane %v294, %v318
      %v320 = vlaneseq
      %v321 = vshrl.u32 %v320, 7
      %v322 = vsub.s32 1, %v321
      %v323 = vrot.slane %v294, %v322
      %v326 = vmul.f32 %v313, %v319
      %v327 = vmul.f32 %v309, %v323
      %v329 = vlaneseq
      %v330 = vshrl.u32 %v329, 7
      %v331 = vsub.s32 0, %v330
      %v332 = vrot.slane %v296, %v331
      %v333 = vlaneseq
      %v334 = vshrl.u32 %v333, 7
      %v335 = vsub.s32 1, %v334
      %v336 = vrot.slane %v296, %v335
      %337 = vrot.lane.b32.xlu0 %v332, 2
      %v338 = vpop.permute.xlu0 %337
      %339 = vrot.lane.b32.xlu0 %v336, 2
      %v340 = vpop.permute.xlu0 %339
      %vm341 = vcmask 15360
      %v342 = vsel %vm341, %v338, %v340
      %v346 = vmul.f32 %v313, %v338
      %v347 = vmul.f32 %v309, %v342
      %v348 = vmul.f32 %v314, %v340
      %349 = vrot.lane.b32.xlu0 %v319, 16
      %v350 = vpop.permute.xlu0 %349
      %351 = vrot.lane.b32.xlu0 %v323, 16
      %v352 = vpop.permute.xlu0 %351
      %vm353 = vcmask 130048
      %v354 = vsel %vm353, %v350, %v352
      %v358 = vmul.f32 %v313, %v350
      %v359 = vmul.f32 %v309, %v354
      %v360 = vmul.f32 %v314, %v352
      %361 = vrot.lane.b32.xlu0 %v332, 18
      %v362 = vpop.permute.xlu0 %361
      %363 = vrot.lane.b32.xlu0 %v336, 18
      %v364 = vpop.permute.xlu0 %363
      %vm365 = vcmask 146432
      %v366 = vsel %vm365, %v362, %v364
      %v370 = vmul.f32 %v313, %v362
      %v371 = vmul.f32 %v309, %v366
      %v372 = vmul.f32 %v314, %v364
      %373 = vrot.lane.b32.xlu0 %v319, 32
      %v374 = vpop.permute.xlu0 %373
      %375 = vrot.lane.b32.xlu0 %v323, 32
      %v376 = vpop.permute.xlu0 %375
      %vm377 = vcmask 261120
      %v378 = vsel %vm377, %v374, %v376
      %v382 = vmul.f32 %v313, %v374
      %v383 = vmul.f32 %v309, %v378
      %v384 = vmul.f32 %v314, %v376
      %385 = vrot.lane.b32.xlu0 %v332, 34
      %v386 = vpop.permute.xlu0 %385
      %387 = vrot.lane.b32.xlu0 %v336, 34
      %v388 = vpop.permute.xlu0 %387
      %vm389 = vcmask 277504
      %v390 = vsel %vm389, %v386, %v388
      %v394 = vmul.f32 %v313, %v386
      %v395 = vmul.f32 %v309, %v390
      %v396 = vmul.f32 %v314, %v388
      %v399 = vrot.slane %v313, 4
      %v400 = vrot.slane %v309, 4
      %v401 = vrot.slane %v314, 4
      %402 = vrot.lane.b32.xlu0 %v399, 127
      %v403 = vpop.permute.xlu0 %402
      %404 = vrot.lane.b32.xlu0 %v400, 127
      %v405 = vpop.permute.xlu0 %404
      %406 = vrot.lane.b32.xlu0 %v401, 127
      %v407 = vpop.permute.xlu0 %406
      %vm408 = vcmask 1039360
      %v409 = vsel %vm408, %v403, %v405
      %v410 = vsel %vm408, %v405, %v407
      %416 = vrot.lane.b32.xlu0 %v346, 126
      %v417 = vpop.permute.xlu0 %416
      %418 = vrot.lane.b32.xlu0 %v347, 126
      %v419 = vpop.permute.xlu0 %418
      %420 = vrot.lane.b32.xlu0 %v348, 126
      %v421 = vpop.permute.xlu0 %420
      %vm422 = vcmask 1031168
      %v423 = vsel %vm422, %v417, %v419
      %v424 = vsel %vm422, %v419, %v421
      %v430 = vrot.slane %v358, 4
      %v431 = vrot.slane %v359, 4
      %v432 = vrot.slane %v360, 4
      %433 = vrot.lane.b32.xlu0 %v430, 112
      %v434 = vpop.permute.xlu0 %433
      %435 = vrot.lane.b32.xlu0 %v431, 112
      %v436 = vpop.permute.xlu0 %435
      %437 = vrot.lane.b32.xlu0 %v432, 112
      %v438 = vpop.permute.xlu0 %437
      %vm439 = vcmask 916480
      %v440 = vsel %vm439, %v434, %v436
      %v441 = vsel %vm439, %v436, %v438
      %444 = vrot.lane.b32.xlu0 %v313, 111
      %v445 = vpop.permute.xlu0 %444
      %446 = vrot.lane.b32.xlu0 %v309, 111
      %v447 = vpop.permute.xlu0 %446
      %448 = vrot.lane.b32.xlu0 %v314, 111
      %v449 = vpop.permute.xlu0 %448
      %vm450 = vcmask 908288
      %v451 = vsel %vm450, %v445, %v447
      %v452 = vsel %vm450, %v447, %v449
      %v458 = vrot.slane %v370, 4
      %v459 = vrot.slane %v371, 4
      %v460 = vrot.slane %v372, 4
      %461 = vrot.lane.b32.xlu0 %v458, 110
      %v462 = vpop.permute.xlu0 %461
      %463 = vrot.lane.b32.xlu0 %v459, 110
      %v464 = vpop.permute.xlu0 %463
      %465 = vrot.lane.b32.xlu0 %v460, 110
      %v466 = vpop.permute.xlu0 %465
      %vm467 = vcmask 900096
      %v468 = vsel %vm467, %v462, %v464
      %v469 = vsel %vm467, %v464, %v466
      %475 = vrot.lane.b32.xlu0 %v382, 96
      %v476 = vpop.permute.xlu0 %475
      %477 = vrot.lane.b32.xlu0 %v383, 96
      %v478 = vpop.permute.xlu0 %477
      %479 = vrot.lane.b32.xlu0 %v384, 96
      %v480 = vpop.permute.xlu0 %479
      %vm481 = vcmask 785408
      %v482 = vsel %vm481, %v476, %v478
      %v483 = vsel %vm481, %v478, %v480
      %486 = vrot.lane.b32.xlu0 %v399, 95
      %v487 = vpop.permute.xlu0 %486
      %488 = vrot.lane.b32.xlu0 %v400, 95
      %v489 = vpop.permute.xlu0 %488
      %490 = vrot.lane.b32.xlu0 %v401, 95
      %v491 = vpop.permute.xlu0 %490
      %vm492 = vcmask 777216
      %v493 = vsel %vm492, %v487, %v489
      %v494 = vsel %vm492, %v489, %v491
      %500 = vrot.lane.b32.xlu0 %v394, 94
      %v501 = vpop.permute.xlu0 %500
      %502 = vrot.lane.b32.xlu0 %v395, 94
      %v503 = vpop.permute.xlu0 %502
      %504 = vrot.lane.b32.xlu0 %v396, 94
      %v505 = vpop.permute.xlu0 %504
      %vm506 = vcmask 769024
      %v507 = vsel %vm506, %v501, %v503
      %v508 = vsel %vm506, %v503, %v505
      %vm509 = vcmask 1043456
      %v510 = vsel %vm509, %v326, %v409
      %v511 = vsel %vm509, %v327, %v410
      %v512 = vsel %vm509, %v423, %v440
      %v513 = vsel %vm509, %v424, %v441
      %v514 = vsel %vm509, %v451, %v468
      %v515 = vsel %vm509, %v452, %v469
      %v516 = vsel %vm509, %v482, %v493
      %v517 = vsel %vm509, %v483, %v494
      %v518 = vld [vmem:[%s2] sm:$0xff]
      %v519 = vld [vmem:[%s2 + $0x8] sm:$0xff]
      %v520 = vld [vmem:[%s2 + $0x10] sm:$0xff]
      %v521 = vld [vmem:[%s2 + $0x18] sm:$0xff]
      %523 = vset.pattern.permute.xlu0 0
      %524 = vperm.xlu0 %523, %v518
      %v525 = vpop.permute.xlu0 %524
      %528 = vset.pattern.permute.xlu0 0
      %529 = vperm.xlu0 %528, %v519
      %v530 = vpop.permute.xlu0 %529
      %533 = vset.pattern.permute.xlu0 0
      %534 = vperm.xlu0 %533, %v520
      %v535 = vpop.permute.xlu0 %534
      %538 = vset.pattern.permute.xlu0 0
      %539 = vperm.xlu0 %538, %v521
      %v540 = vpop.permute.xlu0 %539
      %vm542 = vcmask 293888
      %v544 = vsel %vm542, %v298, 0
      %v547 = vsel %vm542, %v299, 0
      %v550 = vsel %vm542, %v300, 0
      %v553 = vsel %vm542, %v301, 0
      %v555 = vsel %vm509, %v507, 0
      %v557 = vsel %vm509, %v508, 0
      %559 = vmatprep.subr.mxu0 %v511
      %560 = vmatpush1.msra.mxu0 %v510
      %561 = vmatprep.subr.mxu0 %v513
      %562 = vmatpush1.msra.mxu0 %v512
      %563 = vmatprep.subr.mxu0 %v515
      %564 = vmatpush1.msra.mxu0 %v514
      %565 = vmatprep.subr.mxu0 %v517
      %566 = vmatpush1.msra.mxu0 %v516
      %567 = vmatprep.subr.mxu0 %v557
      %568 = vmatpush1.msra.mxu0 %v555
      %569 = vmatprep.subr.mxu0 0.0
      %570 = vmatpush1.msra.mxu0 0.0
      %571 = vmatprep.subr.mxu0 0.0
      %572 = vmatpush1.msra.mxu0 0.0
      %573 = vmatprep.subr.mxu0 0.0
      %574 = vmatpush1.msra.mxu0 0.0
      %575 = vmatprep.subr.mxu0 0.0
      %576 = vmatpush1.msra.mxu0 0.0
      %577 = vmatprep.subr.mxu0 0.0
      %578 = vmatpush1.msra.mxu0 0.0
      %579 = vmatprep.subr.mxu0 0.0
      %580 = vmatpush1.msra.mxu0 0.0
      %581 = vmatprep.subr.mxu0 0.0
      %582 = vmatpush1.msra.mxu0 0.0
      %583 = vmatprep.subr.mxu0 0.0
      %584 = vmatpush1.msra.mxu0 0.0
      %585 = vmatprep.subr.mxu0 0.0
      %586 = vmatpush1.msra.mxu0 0.0
      %587 = vmatprep.subr.mxu0 0.0
      %588 = vmatpush1.msra.mxu0 0.0
      %589 = vmatprep.subr.mxu0 0.0
      %590 = vmatpush1.msra.mxu0 0.0
      %591 = vmatprep.subr.mxu0 0.0
      %592 = vmatpush1.msra.mxu0 0.0
      %593 = vmatprep.subr.mxu0 0.0
      %594 = vmatpush1.msra.mxu0 0.0
      %595 = vmatprep.subr.mxu0 0.0
      %596 = vmatpush1.msra.mxu0 0.0
      %597 = vmatprep.subr.mxu0 0.0
      %598 = vmatpush1.msra.mxu0 0.0
      %599 = vmatprep.subr.mxu0 0.0
      %600 = vmatpush1.msra.mxu0 0.0
      %601 = vmatprep.subr.mxu0 0.0
      %602 = vmatpush1.msra.mxu0 0.0
      %603 = vmatprep.subr.mxu0 0.0
      %604 = vmatpush1.msra.mxu0 0.0
      %605 = vmatprep.subr.mxu0 0.0
      %606 = vmatpush1.msra.mxu0 0.0
      %607 = vmatprep.subr.mxu0 0.0
      %608 = vmatpush1.msra.mxu0 0.0
      %609 = vmatprep.subr.mxu0 0.0
      %610 = vmatpush1.msra.mxu0 0.0
      %611 = vmatprep.subr.mxu0 0.0
      %612 = vmatpush1.msra.mxu0 0.0
      %613 = vmatprep.subr.mxu0 0.0
      %614 = vmatpush1.msra.mxu0 0.0
      %615 = vmatprep.subr.mxu0 0.0
      %616 = vmatpush1.msra.mxu0 0.0
      %617 = vmatprep.subr.mxu0 0.0
      %618 = vmatpush1.msra.mxu0 0.0
      %619 = vmatprep.subr.mxu0 0.0
      %620 = vmatpush1.msra.mxu0 0.0
      %621 = vmatprep.subr.mxu0 0.0
      %622 = vmatpush1.msra.mxu0 0.0
      %623 = vmatprep.mubr.f32.mxu0 0.0
      %624 = vmatmul.mubr.f32.gmra.mrb[0].mxu0 %v544
      %v625 = vpop.f32.mrb[0].mxu0
      %v626 = vadd.f32 %v525, %v625
      %v627 = vpop.f32.mrb[0].mxu0
      %v628 = vadd.f32 %v525, %v627
      %629 = vmatprep.mubr.f32.mxu0 0.0
      %630 = vmatmul.mubr.f32.gmra.mrb[0].mxu0 %v547
      %v631 = vpop.f32.mrb[0].mxu0
      %v632 = vadd.f32 %v530, %v631
      %v633 = vpop.f32.mrb[0].mxu0
      %v634 = vadd.f32 %v530, %v633
      %635 = vmatprep.mubr.f32.mxu0 0.0
      %636 = vmatmul.mubr.f32.gmra.mrb[0].mxu0 %v550
      %v637 = vpop.f32.mrb[0].mxu0
      %v638 = vadd.f32 %v535, %v637
      %v639 = vpop.f32.mrb[0].mxu0
      %v640 = vadd.f32 %v535, %v639
      %641 = vmatprep.mubr.f32.mxu0 0.0
      %642 = vmatmul.mubr.f32.gmra.mrb[0].mxu0 %v553
      %v643 = vpop.f32.mrb[0].mxu0
      %v644 = vadd.f32 %v540, %v643
      %v645 = vpop.f32.mrb[0].mxu0
      %v646 = vadd.f32 %v540, %v645
      %647 = vdwg.mxu0
      %v648 = vmax.f32 %v626, 0.0
      %v649 = vmax.f32 %v628, 0.0
      %v650 = vmax.f32 %v632, 0.0
      %v651 = vmax.f32 %v634, 0.0
      %v652 = vmax.f32 %v638, 0.0
      %v653 = vmax.f32 %v640, 0.0
      %v654 = vmax.f32 %v644, 0.0
      %v655 = vmax.f32 %v646, 0.0
      %v656 = vld [vmem:[%s3] sm:$0xff]
      %v657 = vld [vmem:[%s3 + $0x8] sm:$0xff]
      %v658 = vld [vmem:[%s3 + $0x10] sm:$0xff]
      %667 = vrot.lane.b32.xlu0 %v648, 17
      %v668 = vpop.permute.xlu0 %667
      %669 = vrot.lane.b32.xlu0 %v649, 17
      %v670 = vpop.permute.xlu0 %669
      %671 = vrot.lane.b32.xlu0 %v650, 17
      %v672 = vpop.permute.xlu0 %671
      %673 = vrot.lane.b32.xlu0 %v651, 17
      %v674 = vpop.permute.xlu0 %673
      %675 = vrot.lane.b32.xlu0 %v652, 17
      %v676 = vpop.permute.xlu0 %675
      %677 = vrot.lane.b32.xlu0 %v653, 17
      %v678 = vpop.permute.xlu0 %677
      %679 = vrot.lane.b32.xlu0 %v654, 17
      %v680 = vpop.permute.xlu0 %679
      %681 = vrot.lane.b32.xlu0 %v655, 17
      %v682 = vpop.permute.xlu0 %681
      %v683 = vsel %vm308, %v668, %v670
      %v684 = vsel %vm308, %v672, %v674
      %v685 = vsel %vm308, %v676, %v678
      %v686 = vsel %vm308, %v680, %v682
      %v699 = vsel %vm308, 0.0, %v668
      %v700 = vsel %vm308, 0.0, %v672
      %v701 = vsel %vm308, 0.0, %v676
      %v702 = vsel %vm308, 0.0, %v680
      %v703 = vsel %vm308, %v670, 0.0
      %v704 = vsel %vm308, %v674, 0.0
      %v705 = vsel %vm308, %v678, 0.0
      %v706 = vsel %vm308, %v682, 0.0
      %v707 = vmul.f32 %v699, %v319
      %v708 = vmul.f32 %v683, %v323
      %v709 = vmul.f32 %v700, %v319
      %v710 = vmul.f32 %v684, %v323
      %v711 = vmul.f32 %v701, %v319
      %v712 = vmul.f32 %v685, %v323
      %v713 = vmul.f32 %v702, %v319
      %v714 = vmul.f32 %v686, %v323
      %v715 = vmul.f32 %v699, %v338
      %v716 = vmul.f32 %v683, %v342
      %v717 = vmul.f32 %v703, %v340
      %v718 = vmul.f32 %v700, %v338
      %v719 = vmul.f32 %v684, %v342
      %v720 = vmul.f32 %v704, %v340
      %v721 = vmul.f32 %v701, %v338
      %v722 = vmul.f32 %v685, %v342
      %v723 = vmul.f32 %v705, %v340
      %v724 = vmul.f32 %v702, %v338
      %v725 = vmul.f32 %v686, %v342
      %v726 = vmul.f32 %v706, %v340
      %v727 = vmul.f32 %v699, %v350
      %v728 = vmul.f32 %v683, %v354
      %v729 = vmul.f32 %v703, %v352
      %v730 = vmul.f32 %v700, %v350
      %v731 = vmul.f32 %v684, %v354
      %v732 = vmul.f32 %v704, %v352
      %v733 = vmul.f32 %v701, %v350
      %v734 = vmul.f32 %v685, %v354
      %v735 = vmul.f32 %v705, %v352
      %v736 = vmul.f32 %v702, %v350
      %v737 = vmul.f32 %v686, %v354
      %v738 = vmul.f32 %v706, %v352
      %v739 = vmul.f32 %v699, %v362
      %v740 = vmul.f32 %v683, %v366
      %v741 = vmul.f32 %v703, %v364
      %v742 = vmul.f32 %v700, %v362
      %v743 = vmul.f32 %v684, %v366
      %v744 = vmul.f32 %v704, %v364
      %v745 = vmul.f32 %v701, %v362
      %v746 = vmul.f32 %v685, %v366
      %v747 = vmul.f32 %v705, %v364
      %v748 = vmul.f32 %v702, %v362
      %v749 = vmul.f32 %v686, %v366
      %v750 = vmul.f32 %v706, %v364
      %v751 = vmul.f32 %v699, %v374
      %v752 = vmul.f32 %v683, %v378
      %v753 = vmul.f32 %v703, %v376
      %v754 = vmul.f32 %v700, %v374
      %v755 = vmul.f32 %v684, %v378
      %v756 = vmul.f32 %v704, %v376
      %v757 = vmul.f32 %v701, %v374
      %v758 = vmul.f32 %v685, %v378
      %v759 = vmul.f32 %v705, %v376
      %v760 = vmul.f32 %v702, %v374
      %v761 = vmul.f32 %v686, %v378
      %v762 = vmul.f32 %v706, %v376
      %v763 = vmul.f32 %v699, %v386
      %v764 = vmul.f32 %v683, %v390
      %v765 = vmul.f32 %v703, %v388
      %v766 = vmul.f32 %v700, %v386
      %v767 = vmul.f32 %v684, %v390
      %v768 = vmul.f32 %v704, %v388
      %v769 = vmul.f32 %v701, %v386
      %v770 = vmul.f32 %v685, %v390
      %v771 = vmul.f32 %v705, %v388
      %v772 = vmul.f32 %v702, %v386
      %v773 = vmul.f32 %v686, %v390
      %v774 = vmul.f32 %v706, %v388
      %783 = vrot.lane.b32.xlu0 %v699, 127
      %v784 = vpop.permute.xlu0 %783
      %785 = vrot.lane.b32.xlu0 %v683, 127
      %v786 = vpop.permute.xlu0 %785
      %787 = vrot.lane.b32.xlu0 %v703, 127
      %v788 = vpop.permute.xlu0 %787
      %789 = vrot.lane.b32.xlu0 %v700, 127
      %v790 = vpop.permute.xlu0 %789
      %791 = vrot.lane.b32.xlu0 %v684, 127
      %v792 = vpop.permute.xlu0 %791
      %793 = vrot.lane.b32.xlu0 %v704, 127
      %v794 = vpop.permute.xlu0 %793
      %795 = vrot.lane.b32.xlu0 %v701, 127
      %v796 = vpop.permute.xlu0 %795
      %797 = vrot.lane.b32.xlu0 %v685, 127
      %v798 = vpop.permute.xlu0 %797
      %799 = vrot.lane.b32.xlu0 %v705, 127
      %v800 = vpop.permute.xlu0 %799
      %801 = vrot.lane.b32.xlu0 %v702, 127
      %v802 = vpop.permute.xlu0 %801
      %803 = vrot.lane.b32.xlu0 %v686, 127
      %v804 = vpop.permute.xlu0 %803
      %805 = vrot.lane.b32.xlu0 %v706, 127
      %v806 = vpop.permute.xlu0 %805
      %v807 = vsel %vm408, %v784, %v786
      %v808 = vsel %vm408, %v786, %v788
      %v809 = vsel %vm408, %v790, %v792
      %v810 = vsel %vm408, %v792, %v794
      %v811 = vsel %vm408, %v796, %v798
      %v812 = vsel %vm408, %v798, %v800
      %v813 = vsel %vm408, %v802, %v804
      %v814 = vsel %vm408, %v804, %v806
      %835 = vrot.lane.b32.xlu0 %v715, 126
      %v836 = vpop.permute.xlu0 %835
      %837 = vrot.lane.b32.xlu0 %v716, 126
      %v838 = vpop.permute.xlu0 %837
      %839 = vrot.lane.b32.xlu0 %v717, 126
      %v840 = vpop.permute.xlu0 %839
      %841 = vrot.lane.b32.xlu0 %v718, 126
      %v842 = vpop.permute.xlu0 %841
      %843 = vrot.lane.b32.xlu0 %v719, 126
      %v844 = vpop.permute.xlu0 %843
      %845 = vrot.lane.b32.xlu0 %v720, 126
      %v846 = vpop.permute.xlu0 %845
      %847 = vrot.lane.b32.xlu0 %v721, 126
      %v848 = vpop.permute.xlu0 %847
      %849 = vrot.lane.b32.xlu0 %v722, 126
      %v850 = vpop.permute.xlu0 %849
      %851 = vrot.lane.b32.xlu0 %v723, 126
      %v852 = vpop.permute.xlu0 %851
      %853 = vrot.lane.b32.xlu0 %v724, 126
      %v854 = vpop.permute.xlu0 %853
      %855 = vrot.lane.b32.xlu0 %v725, 126
      %v856 = vpop.permute.xlu0 %855
      %857 = vrot.lane.b32.xlu0 %v726, 126
      %v858 = vpop.permute.xlu0 %857
      %v859 = vsel %vm422, %v836, %v838
      %v860 = vsel %vm422, %v838, %v840
      %v861 = vsel %vm422, %v842, %v844
      %v862 = vsel %vm422, %v844, %v846
      %v863 = vsel %vm422, %v848, %v850
      %v864 = vsel %vm422, %v850, %v852
      %v865 = vsel %vm422, %v854, %v856
      %v866 = vsel %vm422, %v856, %v858
      %887 = vrot.lane.b32.xlu0 %v727, 112
      %v888 = vpop.permute.xlu0 %887
      %889 = vrot.lane.b32.xlu0 %v728, 112
      %v890 = vpop.permute.xlu0 %889
      %891 = vrot.lane.b32.xlu0 %v729, 112
      %v892 = vpop.permute.xlu0 %891
      %893 = vrot.lane.b32.xlu0 %v730, 112
      %v894 = vpop.permute.xlu0 %893
      %895 = vrot.lane.b32.xlu0 %v731, 112
      %v896 = vpop.permute.xlu0 %895
      %897 = vrot.lane.b32.xlu0 %v732, 112
      %v898 = vpop.permute.xlu0 %897
      %899 = vrot.lane.b32.xlu0 %v733, 112
      %v900 = vpop.permute.xlu0 %899
      %901 = vrot.lane.b32.xlu0 %v734, 112
      %v902 = vpop.permute.xlu0 %901
      %903 = vrot.lane.b32.xlu0 %v735, 112
      %v904 = vpop.permute.xlu0 %903
      %905 = vrot.lane.b32.xlu0 %v736, 112
      %v906 = vpop.permute.xlu0 %905
      %907 = vrot.lane.b32.xlu0 %v737, 112
      %v908 = vpop.permute.xlu0 %907
      %909 = vrot.lane.b32.xlu0 %v738, 112
      %v910 = vpop.permute.xlu0 %909
      %v911 = vsel %vm439, %v888, %v890
      %v912 = vsel %vm439, %v890, %v892
      %v913 = vsel %vm439, %v894, %v896
      %v914 = vsel %vm439, %v896, %v898
      %v915 = vsel %vm439, %v900, %v902
      %v916 = vsel %vm439, %v902, %v904
      %v917 = vsel %vm439, %v906, %v908
      %v918 = vsel %vm439, %v908, %v910
      %927 = vrot.lane.b32.xlu0 %v699, 111
      %v928 = vpop.permute.xlu0 %927
      %929 = vrot.lane.b32.xlu0 %v683, 111
      %v930 = vpop.permute.xlu0 %929
      %931 = vrot.lane.b32.xlu0 %v703, 111
      %v932 = vpop.permute.xlu0 %931
      %933 = vrot.lane.b32.xlu0 %v700, 111
      %v934 = vpop.permute.xlu0 %933
      %935 = vrot.lane.b32.xlu0 %v684, 111
      %v936 = vpop.permute.xlu0 %935
      %937 = vrot.lane.b32.xlu0 %v704, 111
      %v938 = vpop.permute.xlu0 %937
      %939 = vrot.lane.b32.xlu0 %v701, 111
      %v940 = vpop.permute.xlu0 %939
      %941 = vrot.lane.b32.xlu0 %v685, 111
      %v942 = vpop.permute.xlu0 %941
      %943 = vrot.lane.b32.xlu0 %v705, 111
      %v944 = vpop.permute.xlu0 %943
      %945 = vrot.lane.b32.xlu0 %v702, 111
      %v946 = vpop.permute.xlu0 %945
      %947 = vrot.lane.b32.xlu0 %v686, 111
      %v948 = vpop.permute.xlu0 %947
      %949 = vrot.lane.b32.xlu0 %v706, 111
      %v950 = vpop.permute.xlu0 %949
      %v951 = vsel %vm450, %v928, %v930
      %v952 = vsel %vm450, %v930, %v932
      %v953 = vsel %vm450, %v934, %v936
      %v954 = vsel %vm450, %v936, %v938
      %v955 = vsel %vm450, %v940, %v942
      %v956 = vsel %vm450, %v942, %v944
      %v957 = vsel %vm450, %v946, %v948
      %v958 = vsel %vm450, %v948, %v950
      %979 = vrot.lane.b32.xlu0 %v739, 110
      %v980 = vpop.permute.xlu0 %979
      %981 = vrot.lane.b32.xlu0 %v740, 110
      %v982 = vpop.permute.xlu0 %981
      %983 = vrot.lane.b32.xlu0 %v741, 110
      %v984 = vpop.permute.xlu0 %983
      %985 = vrot.lane.b32.xlu0 %v742, 110
      %v986 = vpop.permute.xlu0 %985
      %987 = vrot.lane.b32.xlu0 %v743, 110
      %v988 = vpop.permute.xlu0 %987
      %989 = vrot.lane.b32.xlu0 %v744, 110
      %v990 = vpop.permute.xlu0 %989
      %991 = vrot.lane.b32.xlu0 %v745, 110
      %v992 = vpop.permute.xlu0 %991
      %993 = vrot.lane.b32.xlu0 %v746, 110
      %v994 = vpop.permute.xlu0 %993
      %995 = vrot.lane.b32.xlu0 %v747, 110
      %v996 = vpop.permute.xlu0 %995
      %997 = vrot.lane.b32.xlu0 %v748, 110
      %v998 = vpop.permute.xlu0 %997
      %999 = vrot.lane.b32.xlu0 %v749, 110
      %v1000 = vpop.permute.xlu0 %999
      %1001 = vrot.lane.b32.xlu0 %v750, 110
      %v1002 = vpop.permute.xlu0 %1001
      %v1003 = vsel %vm467, %v980, %v982
      %v1004 = vsel %vm467, %v982, %v984
      %v1005 = vsel %vm467, %v986, %v988
      %v1006 = vsel %vm467, %v988, %v990
      %v1007 = vsel %vm467, %v992, %v994
      %v1008 = vsel %vm467, %v994, %v996
      %v1009 = vsel %vm467, %v998, %v1000
      %v1010 = vsel %vm467, %v1000, %v1002
      %1031 = vrot.lane.b32.xlu0 %v751, 96
      %v1032 = vpop.permute.xlu0 %1031
      %1033 = vrot.lane.b32.xlu0 %v752, 96
      %v1034 = vpop.permute.xlu0 %1033
      %1035 = vrot.lane.b32.xlu0 %v753, 96
      %v1036 = vpop.permute.xlu0 %1035
      %1037 = vrot.lane.b32.xlu0 %v754, 96
      %v1038 = vpop.permute.xlu0 %1037
      %1039 = vrot.lane.b32.xlu0 %v755, 96
      %v1040 = vpop.permute.xlu0 %1039
      %1041 = vrot.lane.b32.xlu0 %v756, 96
      %v1042 = vpop.permute.xlu0 %1041
      %1043 = vrot.lane.b32.xlu0 %v757, 96
      %v1044 = vpop.permute.xlu0 %1043
      %1045 = vrot.lane.b32.xlu0 %v758, 96
      %v1046 = vpop.permute.xlu0 %1045
      %1047 = vrot.lane.b32.xlu0 %v759, 96
      %v1048 = vpop.permute.xlu0 %1047
      %1049 = vrot.lane.b32.xlu0 %v760, 96
      %v1050 = vpop.permute.xlu0 %1049
      %1051 = vrot.lane.b32.xlu0 %v761, 96
      %v1052 = vpop.permute.xlu0 %1051
      %1053 = vrot.lane.b32.xlu0 %v762, 96
      %v1054 = vpop.permute.xlu0 %1053
      %v1055 = vsel %vm481, %v1032, %v1034
      %v1056 = vsel %vm481, %v1034, %v1036
      %v1057 = vsel %vm481, %v1038, %v1040
      %v1058 = vsel %vm481, %v1040, %v1042
      %v1059 = vsel %vm481, %v1044, %v1046
      %v1060 = vsel %vm481, %v1046, %v1048
      %v1061 = vsel %vm481, %v1050, %v1052
      %v1062 = vsel %vm481, %v1052, %v1054
      %1071 = vrot.lane.b32.xlu0 %v699, 95
      %v1072 = vpop.permute.xlu0 %1071
      %1073 = vrot.lane.b32.xlu0 %v683, 95
      %v1074 = vpop.permute.xlu0 %1073
      %1075 = vrot.lane.b32.xlu0 %v703, 95
      %v1076 = vpop.permute.xlu0 %1075
      %1077 = vrot.lane.b32.xlu0 %v700, 95
      %v1078 = vpop.permute.xlu0 %1077
      %1079 = vrot.lane.b32.xlu0 %v684, 95
      %v1080 = vpop.permute.xlu0 %1079
      %1081 = vrot.lane.b32.xlu0 %v704, 95
      %v1082 = vpop.permute.xlu0 %1081
      %1083 = vrot.lane.b32.xlu0 %v701, 95
      %v1084 = vpop.permute.xlu0 %1083
      %1085 = vrot.lane.b32.xlu0 %v685, 95
      %v1086 = vpop.permute.xlu0 %1085
      %1087 = vrot.lane.b32.xlu0 %v705, 95
      %v1088 = vpop.permute.xlu0 %1087
      %1089 = vrot.lane.b32.xlu0 %v702, 95
      %v1090 = vpop.permute.xlu0 %1089
      %1091 = vrot.lane.b32.xlu0 %v686, 95
      %v1092 = vpop.permute.xlu0 %1091
      %1093 = vrot.lane.b32.xlu0 %v706, 95
      %v1094 = vpop.permute.xlu0 %1093
      %v1095 = vsel %vm492, %v1072, %v1074
      %v1096 = vsel %vm492, %v1074, %v1076
      %v1097 = vsel %vm492, %v1078, %v1080
      %v1098 = vsel %vm492, %v1080, %v1082
      %v1099 = vsel %vm492, %v1084, %v1086
      %v1100 = vsel %vm492, %v1086, %v1088
      %v1101 = vsel %vm492, %v1090, %v1092
      %v1102 = vsel %vm492, %v1092, %v1094
      %1123 = vrot.lane.b32.xlu0 %v763, 94
      %v1124 = vpop.permute.xlu0 %1123
      %1125 = vrot.lane.b32.xlu0 %v764, 94
      %v1126 = vpop.permute.xlu0 %1125
      %1127 = vrot.lane.b32.xlu0 %v765, 94
      %v1128 = vpop.permute.xlu0 %1127
      %1129 = vrot.lane.b32.xlu0 %v766, 94
      %v1130 = vpop.permute.xlu0 %1129
      %1131 = vrot.lane.b32.xlu0 %v767, 94
      %v1132 = vpop.permute.xlu0 %1131
      %1133 = vrot.lane.b32.xlu0 %v768, 94
      %v1134 = vpop.permute.xlu0 %1133
      %1135 = vrot.lane.b32.xlu0 %v769, 94
      %v1136 = vpop.permute.xlu0 %1135
      %1137 = vrot.lane.b32.xlu0 %v770, 94
      %v1138 = vpop.permute.xlu0 %1137
      %1139 = vrot.lane.b32.xlu0 %v771, 94
      %v1140 = vpop.permute.xlu0 %1139
      %1141 = vrot.lane.b32.xlu0 %v772, 94
      %v1142 = vpop.permute.xlu0 %1141
      %1143 = vrot.lane.b32.xlu0 %v773, 94
      %v1144 = vpop.permute.xlu0 %1143
      %1145 = vrot.lane.b32.xlu0 %v774, 94
      %v1146 = vpop.permute.xlu0 %1145
      %v1147 = vsel %vm506, %v1124, %v1126
      %v1148 = vsel %vm506, %v1126, %v1128
      %v1149 = vsel %vm506, %v1130, %v1132
      %v1150 = vsel %vm506, %v1132, %v1134
      %v1151 = vsel %vm506, %v1136, %v1138
      %v1152 = vsel %vm506, %v1138, %v1140
      %v1153 = vsel %vm506, %v1142, %v1144
      %v1154 = vsel %vm506, %v1144, %v1146
      %v1163 = vld [vmem:[%s4] sm:$0xff]
      %1165 = vset.pattern.permute.xlu0 0
      %1166 = vperm.xlu0 %1165, %v1163
      %v1167 = vpop.permute.xlu0 %1166
      %v1170 = vsel %vm377, %v658, 0
      %1172 = vmatprep.subr.mxu0 %v708
      %1173 = vmatpush1.msra.mxu0 %v707
      %1174 = vmatprep.subr.mxu0 %v710
      %1175 = vmatpush1.msra.mxu0 %v709
      %1176 = vmatprep.subr.mxu0 %v712
      %1177 = vmatpush1.msra.mxu0 %v711
      %1178 = vmatprep.subr.mxu0 %v714
      %1179 = vmatpush1.msra.mxu0 %v713
      %1180 = vmatprep.subr.mxu0 %v808
      %1181 = vmatpush1.msra.mxu0 %v807
      %1182 = vmatprep.subr.mxu0 %v810
      %1183 = vmatpush1.msra.mxu0 %v809
      %1184 = vmatprep.subr.mxu0 %v812
      %1185 = vmatpush1.msra.mxu0 %v811
      %1186 = vmatprep.subr.mxu0 %v814
      %1187 = vmatpush1.msra.mxu0 %v813
      %1188 = vmatprep.subr.mxu0 %v860
      %1189 = vmatpush1.msra.mxu0 %v859
      %1190 = vmatprep.subr.mxu0 %v862
      %1191 = vmatpush1.msra.mxu0 %v861
      %1192 = vmatprep.subr.mxu0 %v864
      %1193 = vmatpush1.msra.mxu0 %v863
      %1194 = vmatprep.subr.mxu0 %v866
      %1195 = vmatpush1.msra.mxu0 %v865
      %1196 = vmatprep.subr.mxu0 %v912
      %1197 = vmatpush1.msra.mxu0 %v911
      %1198 = vmatprep.subr.mxu0 %v914
      %1199 = vmatpush1.msra.mxu0 %v913
      %1200 = vmatprep.subr.mxu0 %v916
      %1201 = vmatpush1.msra.mxu0 %v915
      %1202 = vmatprep.subr.mxu0 %v918
      %1203 = vmatpush1.msra.mxu0 %v917
      %1204 = vmatprep.subr.mxu0 %v952
      %1205 = vmatpush1.msra.mxu0 %v951
      %1206 = vmatprep.subr.mxu0 %v954
      %1207 = vmatpush1.msra.mxu0 %v953
      %1208 = vmatprep.subr.mxu0 %v956
      %1209 = vmatpush1.msra.mxu0 %v955
      %1210 = vmatprep.subr.mxu0 %v958
      %1211 = vmatpush1.msra.mxu0 %v957
      %1212 = vmatprep.subr.mxu0 %v1004
      %1213 = vmatpush1.msra.mxu0 %v1003
      %1214 = vmatprep.subr.mxu0 %v1006
      %1215 = vmatpush1.msra.mxu0 %v1005
      %1216 = vmatprep.subr.mxu0 %v1008
      %1217 = vmatpush1.msra.mxu0 %v1007
      %1218 = vmatprep.subr.mxu0 %v1010
      %1219 = vmatpush1.msra.mxu0 %v1009
      %1220 = vmatprep.subr.mxu0 %v1056
      %1221 = vmatpush1.msra.mxu0 %v1055
      %1222 = vmatprep.subr.mxu0 %v1058
      %1223 = vmatpush1.msra.mxu0 %v1057
      %1224 = vmatprep.subr.mxu0 %v1060
      %1225 = vmatpush1.msra.mxu0 %v1059
      %1226 = vmatprep.subr.mxu0 %v1062
      %1227 = vmatpush1.msra.mxu0 %v1061
      %1228 = vmatprep.subr.mxu0 %v1096
      %1229 = vmatpush1.msra.mxu0 %v1095
      %1230 = vmatprep.subr.mxu0 %v1098
      %1231 = vmatpush1.msra.mxu0 %v1097
      %1232 = vmatprep.subr.mxu0 %v1100
      %1233 = vmatpush1.msra.mxu0 %v1099
      %1234 = vmatprep.subr.mxu0 %v1102
      %1235 = vmatpush1.msra.mxu0 %v1101
      %1236 = vmatprep.mubr.f32.mxu0 %v657
      %1237 = vmatmul.mubr.f32.gmra.mrb[0].mxu0 %v656
      %v1238 = vpop.f32.mrb[0].mxu0
      %v1239 = vadd.f32 %v1167, %v1238
      %v1240 = vpop.f32.mrb[0].mxu0
      %v1241 = vadd.f32 %v1167, %v1240
      %1242 = vdwg.mxu0
      %1243 = vmatprep.subr.mxu0 %v1148
      %1244 = vmatpush1.msra.mxu0 %v1147
      %1245 = vmatprep.subr.mxu0 %v1150
      %1246 = vmatpush1.msra.mxu0 %v1149
      %1247 = vmatprep.subr.mxu0 %v1152
      %1248 = vmatpush1.msra.mxu0 %v1151
      %1249 = vmatprep.subr.mxu0 %v1154
      %1250 = vmatpush1.msra.mxu0 %v1153
      %1251 = vmatprep.subr.mxu0 0.0
      %1252 = vmatpush1.msra.mxu0 0.0
      %1253 = vmatprep.subr.mxu0 0.0
      %1254 = vmatpush1.msra.mxu0 0.0
      %1255 = vmatprep.subr.mxu0 0.0
      %1256 = vmatpush1.msra.mxu0 0.0
      %1257 = vmatprep.subr.mxu0 0.0
      %1258 = vmatpush1.msra.mxu0 0.0
      %1259 = vmatprep.subr.mxu0 0.0
      %1260 = vmatpush1.msra.mxu0 0.0
      %1261 = vmatprep.subr.mxu0 0.0
      %1262 = vmatpush1.msra.mxu0 0.0
      %1263 = vmatprep.subr.mxu0 0.0
      %1264 = vmatpush1.msra.mxu0 0.0
      %1265 = vmatprep.subr.mxu0 0.0
      %1266 = vmatpush1.msra.mxu0 0.0
      %1267 = vmatprep.subr.mxu0 0.0
      %1268 = vmatpush1.msra.mxu0 0.0
      %1269 = vmatprep.subr.mxu0 0.0
      %1270 = vmatpush1.msra.mxu0 0.0
      %1271 = vmatprep.subr.mxu0 0.0
      %1272 = vmatpush1.msra.mxu0 0.0
      %1273 = vmatprep.subr.mxu0 0.0
      %1274 = vmatpush1.msra.mxu0 0.0
      %1275 = vmatprep.subr.mxu0 0.0
      %1276 = vmatpush1.msra.mxu0 0.0
      %1277 = vmatprep.subr.mxu0 0.0
      %1278 = vmatpush1.msra.mxu0 0.0
      %1279 = vmatprep.subr.mxu0 0.0
      %1280 = vmatpush1.msra.mxu0 0.0
      %1281 = vmatprep.subr.mxu0 0.0
      %1282 = vmatpush1.msra.mxu0 0.0
      %1283 = vmatprep.subr.mxu0 0.0
      %1284 = vmatpush1.msra.mxu0 0.0
      %1285 = vmatprep.subr.mxu0 0.0
      %1286 = vmatpush1.msra.mxu0 0.0
      %1287 = vmatprep.subr.mxu0 0.0
      %1288 = vmatpush1.msra.mxu0 0.0
      %1289 = vmatprep.subr.mxu0 0.0
      %1290 = vmatpush1.msra.mxu0 0.0
      %1291 = vmatprep.subr.mxu0 0.0
      %1292 = vmatpush1.msra.mxu0 0.0
      %1293 = vmatprep.subr.mxu0 0.0
      %1294 = vmatpush1.msra.mxu0 0.0
      %1295 = vmatprep.subr.mxu0 0.0
      %1296 = vmatpush1.msra.mxu0 0.0
      %1297 = vmatprep.subr.mxu0 0.0
      %1298 = vmatpush1.msra.mxu0 0.0
      %1299 = vmatprep.subr.mxu0 0.0
      %1300 = vmatpush1.msra.mxu0 0.0
      %1301 = vmatprep.subr.mxu0 0.0
      %1302 = vmatpush1.msra.mxu0 0.0
      %1303 = vmatprep.subr.mxu0 0.0
      %1304 = vmatpush1.msra.mxu0 0.0
      %1305 = vmatprep.subr.mxu0 0.0
      %1306 = vmatpush1.msra.mxu0 0.0
      %1307 = vmatprep.mubr.f32.mxu0 0.0
      %1308 = vmatmul.mubr.f32.gmra.mrb[0].mxu0 %v1170
      %v1309 = vpop.f32.mrb[0].mxu0
      %v1310 = vadd.f32 %v1239, %v1309
      %v1311 = vpop.f32.mrb[0].mxu0
      %v1312 = vadd.f32 %v1241, %v1311
      %1313 = vdwg.mxu0
      %v1316 = vrot.slane %v1310, 1
      %v1317 = vrot.slane %v1312, 1
      %v1320 = vmax.f32 %v1310, %v1316
      %v1321 = vmax.f32 %v1312, %v1317
      %v1322 = vsub.f32 %v1310, %v1320
      %v1323 = vsub.f32 %v1312, %v1321
      %v1324 = vmul.f32 %v1322, 1.442695
      %v1325 = vpow.pop %v1324
      %v1326 = vmul.f32 %v1323, 1.442695
      %v1327 = vpow.pop %v1326
      %v1330 = vrot.slane %v1320, 7
      %v1331 = vrot.slane %v1321, 7
      %v1334 = vsub.f32 %v1310, %v1330
      %v1335 = vsub.f32 %v1312, %v1331
      %v1336 = vmul.f32 %v1334, 1.442695
      %v1337 = vpow.pop %v1336
      %v1338 = vmul.f32 %v1335, 1.442695
      %v1339 = vpow.pop %v1338
      %v1342 = vrot.slane %v1337, 1
      %v1343 = vrot.slane %v1339, 1
      %v1346 = vadd.f32 %v1325, %v1342
      %v1347 = vadd.f32 %v1327, %v1343
      %v1348 = vrcp.pop %v1346
      %v1349 = vrcp.pop %v1347
      %v1350 = vmul.f32 %v1325, %v1348
      %v1351 = vmul.f32 %v1327, %v1349
      %v1354 = vrot.slane %v1348, 7
      %v1355 = vrot.slane %v1349, 7
      %v1358 = vmul.f32 %v1337, %v1354
      %v1359 = vmul.f32 %v1339, %v1355
      %vm1360 = vcmask 1040384
      %v1361 = vsel %vm1360, %v1350, %v1358
      %v1362 = vsel %vm1360, %v1351, %v1359
      %v1365 = vcombine.low %v1361, %v1362
      %v1367 = vunpack.c.l.s4 1983009808
      %v1368 = vunpack.c.0.s8 %v1367
      %v1369 = vlaneseq
      %v1370 = vshrl.u32 %v1369, 7
      %v1371 = vsub.s32 %v1368, %v1370
      %v1372 = vrot.slane %v1365, %v1371
      %1374 = vst [vmem:[%s286] sm:$0xf] %v1372
      %v1376 = vcombine.high %v292, %v292
      %v1377 = vrot.slane %v292, 6
      %v1378 = vrot.slane %v1376, 6
      %v1381 = vadd.f32 %v1310, %v1377
      %v1382 = vadd.f32 %v1312, %v1378
      %v1385 = vrot.slane %v1381, 2
      %v1386 = vrot.slane %v1382, 2
      %v1389 = vrot.slane %v1310, 2
      %v1390 = vrot.slane %v1312, 2
      %vm1393 = vcmask 1041408
      %v1394 = vsel %vm1393, %v1385, %v1389
      %v1395 = vsel %vm1393, %v1386, %v1390
      %v1398 = vcombine.low %v1394, %v1395
      %1400 = vst [vmem:[%s291] sm:$0xff] %v1398
      %p1401 = scmp.lt.s32.totalorder %s19, 1
      %s1402 = scalar_select %p1401, %s19, 1
      %s1403 = smul.addr %s1402, 2
      %s1404 = smul.addr %s1403, 2
      %s1405 = scalar_lea.vmem %s6, %s1404
      %p1406 = scmp.lt.s32.totalorder %s19, 1
      %s1407 = scalar_select %p1406, %s19, 1
      %s1408 = smul.addr %s1407, 2
      %s1409 = smul.addr %s1408, 4
      %s1410 = scalar_lea.vmem %s7, %s1409
      // Predicated region
      $region45: #{mapnet_forward.1} parent=43 // pred_check
        %p1411 = pneg %p168
      $region46: #{mapnet_forward.1} parent=43 // pred_check_branch
        %1413 = sbr.rel (%p1411) target = $region48
      $region47: #{mapnet_forward.1} parent=43 // pred_region
        _
      $region48: #{mapnet_forward.1} parent=43 // pred_fallthru
        _
      // Predicated region
      $region49: #{mapnet_forward.1} parent=43 // pred_check
        %p1414 = pneg %p194
      $region50: #{mapnet_forward.1} parent=43 // pred_check_branch
        %1416 = sbr.rel (%p1414) target = $region52
      $region51: #{mapnet_forward.1} parent=43 // pred_region
        _
      $region52: #{mapnet_forward.1} parent=43 // pred_fallthru
        _
    $region44: #{mapnet_forward.1} parent=5 // pred_fallthru
      _
    %p1417 = scmp.le.s32.totalorder 2, %s14
    // Predicated region
    $region53: #{mapnet_forward.1} parent=5 // pred_check
      %p1418 = pneg %p1417
    $region54: #{mapnet_forward.1} parent=5 // pred_check_branch
      %1420 = sbr.rel (%p1418) target = $region56
    $region55: #{mapnet_forward.1} parent=5 // pred_region
      %s1421 = ssub.s32 %s14, 2
      // Predicated region
      $region57: #{mapnet_forward.1} parent=55 // pred_check
        %p1422 = pneg %p174
      $region58: #{mapnet_forward.1} parent=55 // pred_check_branch
        %1424 = sbr.rel (%p1422) target = $region60
      $region59: #{mapnet_forward.1} parent=55 // pred_region
        %p1425 = scmp.lt.s32.totalorder %s20, 1
        %s1426 = scalar_select %p1425, %s20, 1
        %s1427 = smul.addr %s1426, 2
        %s1428 = smul.addr %s1427, 2
        %s1429 = scalar_lea.vmem %s6, %s1428
      $region60: #{mapnet_forward.1} parent=55 // pred_fallthru
        _
      // Predicated region
      $region61: #{mapnet_forward.1} parent=55 // pred_check
        %p1430 = pneg %p200
      $region62: #{mapnet_forward.1} parent=55 // pred_check_branch
        %1432 = sbr.rel (%p1430) target = $region64
      $region63: #{mapnet_forward.1} parent=55 // pred_region
        %p1433 = scmp.lt.s32.totalorder %s20, 1
        %s1434 = scalar_select %p1433, %s20, 1
        %s1435 = smul.addr %s1434, 2
        %s1436 = smul.addr %s1435, 4
        %s1437 = scalar_lea.vmem %s7, %s1436
      $region64: #{mapnet_forward.1} parent=55 // pred_fallthru
        _
    $region56: #{mapnet_forward.1} parent=5 // pred_fallthru
      _
  $region6: #{mapnet_forward.1} parent=0 // loop_footer
    %s18 = sadd.s32 1, %s14
  $region7: #{mapnet_forward.1} parent=0 // loop_footer_branch
    %13 = sbr.rel target = $region3
  $region8: #{mapnet_forward.1} parent=0 // loop_exit
    _

</llo_original>
